<compile_context>
chip_gen: v6e
topology: v6e:2x2x1
jax: 0.10.0
libtpu: 0.0.40
codegen_flags: <defaults>
</compile_context>

<pallas_src>
import functools
import math

import jax
import jax.numpy as jnp
from jax.experimental import pallas as pl
from jax.experimental.pallas import tpu as pltpu


# ----------------------------------------------------------------------------
# small helpers
# ----------------------------------------------------------------------------
def _round_up(x, m):
    return ((x + m - 1) // m) * m


@functools.lru_cache(maxsize=None)
def _device_kind():
    try:
        return jax.devices()[0].device_kind.lower()
    except Exception:  # pragma: no cover
        return ""


def _is_megacore():
    k = _device_kind()
    return ("v7" in k) or ("7x" in k)


def _vmem_limit_bytes():
    k = _device_kind()
    if ("v5" in k) or ("v6" in k):
        return 96 * 1024 * 1024      # 128 MiB physical -> big tiles / deep pipeline
    return 48 * 1024 * 1024          # conservative for v7x (64 MiB) / unknown


def _cparams(dims):
    return pltpu.CompilerParams(dimension_semantics=dims,
                                vmem_limit_bytes=_vmem_limit_bytes())


def _pick_tm(n, cap=512):
    """Row tile: one maximal tile on single-TensorCore chips; split >=2 ways
    only on megacore (v7x) so both cores get work."""
    n16 = _round_up(max(n, 1), 16)
    if _is_megacore() and n16 >= 32:
        tm = min(cap, _round_up((n16 + 1) // 2, 16))
    else:
        tm = min(cap, n16)
    return max(tm, 16)


def _pad_rows(x, m):
    pad = (-x.shape[0]) % m
    return jnp.pad(x, ((0, pad), (0, 0))) if pad else x


def _pad_last(x, to):
    pad = to - x.shape[-1]
    if pad == 0:
        return x
    cfg = [(0, 0)] * (x.ndim - 1) + [(0, pad)]
    return jnp.pad(x, cfg)


def _layernorm(x, eps=1e-5):
    mu = jnp.mean(x, axis=-1, keepdims=True)
    var = jnp.mean(jnp.square(x - mu), axis=-1, keepdims=True)
    return (x - mu) * jax.lax.rsqrt(var + eps)


# ----------------------------------------------------------------------------
# Pallas kernels
# ----------------------------------------------------------------------------
def _proj2_kernel(x_ref, g1_ref, be1_ref, w1_ref, b1_ref,
                  g2_ref, be2_ref, w2_ref, b2_ref, o_ref, *, relu1, relu2):
    """Fused 2-layer input projection: LN->Linear(->ReLU) -> LN->Linear(->ReLU).

    x:[TM,Din] (bf16 transport) -> o:[TM,Dout_pad] bf16 (padded cols are exactly
    zero because padded weight cols / bias are zero).  LN/epilogue in f32.
    """
    x = x_ref[...].astype(jnp.float32)
    xn = _layernorm(x) * g1_ref[...] + be1_ref[...]
    h = jnp.dot(xn.astype(jnp.bfloat16), w1_ref[...],
                preferred_element_type=jnp.float32) + b1_ref[...]
    if relu1:
        h = jnp.maximum(h, 0.0)
    hn = _layernorm(h) * g2_ref[...] + be2_ref[...]
    y = jnp.dot(hn.astype(jnp.bfloat16), w2_ref[...],
                preferred_element_type=jnp.float32) + b2_ref[...]
    if relu2:
        y = jnp.maximum(y, 0.0)
    o_ref[...] = y.astype(o_ref.dtype)


def input_proj2(x, p1, p2, *, dout_pad, tm_cap=512):
    """x: [N, Din] rows. Returns [N, dout_pad] bf16 (padded layout is carried
    to the downstream kernels -> no feature-dim slice copy)."""
    g1, be1, w1, b1, _relu1 = p1
    g2, be2, w2, b2, _relu2 = p2
    n, din = x.shape
    dmid = w1.shape[1]
    w2p = _pad_last(w2, dout_pad).astype(jnp.bfloat16)
    b2p = _pad_last(b2.reshape(1, -1), dout_pad)

    tm = _pick_tm(n, tm_cap)
    xp = _pad_rows(x.astype(jnp.bfloat16), tm)
    np_ = xp.shape[0]

    out = pl.pallas_call(
        functools.partial(_proj2_kernel, relu1=_relu1, relu2=_relu2),
        out_shape=jax.ShapeDtypeStruct((np_, dout_pad), jnp.bfloat16),
        grid_spec=pltpu.PrefetchScalarGridSpec(
            num_scalar_prefetch=0,
            grid=(np_ // tm,),
            in_specs=[
                pl.BlockSpec((tm, din), lambda i: (i, 0)),
                pl.BlockSpec((1, din), lambda i: (0, 0)),
                pl.BlockSpec((1, din), lambda i: (0, 0)),
                pl.BlockSpec((din, dmid), lambda i: (0, 0)),
                pl.BlockSpec((1, dmid), lambda i: (0, 0)),
                pl.BlockSpec((1, dmid), lambda i: (0, 0)),
                pl.BlockSpec((1, dmid), lambda i: (0, 0)),
                pl.BlockSpec((dmid, dout_pad), lambda i: (0, 0)),
                pl.BlockSpec((1, dout_pad), lambda i: (0, 0)),
            ],
            out_specs=pl.BlockSpec((tm, dout_pad), lambda i: (i, 0)),
        ),
        compiler_params=_cparams(("parallel",)),
    )(xp, g1.reshape(1, -1), be1.reshape(1, -1), w1.astype(jnp.bfloat16),
      b1.reshape(1, -1), g2.reshape(1, -1), be2.reshape(1, -1), w2p, b2p)
    return out[:n]


def _proj_norm_kernel(x_ref, w_ref, b_ref, o_ref):
    """Linear projection (f32 matmul; contrastive embeddings) + L2 normalize.

    Padded output columns have zero weights/bias -> contribute 0 to the norm.
    """
    x = x_ref[...].astype(jnp.float32)
    y = jnp.dot(x, w_ref[...], preferred_element_type=jnp.float32) + b_ref[...]
    sumsq = jnp.sum(y * y, axis=-1, keepdims=True)
    o_ref[...] = (y * jax.lax.rsqrt(jnp.maximum(sumsq, 1e-24))).astype(o_ref.dtype)


def proj_norm(x, params, *, tm_cap=512):
    """x: [N, Dp] (128-lane padded bf16) -> [N, dout] f32 (final module output)."""
    w, b = params
    n, dinp = x.shape
    dout = w.shape[1]
    dout_p = _round_up(dout, 128)
    wp = jnp.pad(w, ((0, dinp - w.shape[0]), (0, dout_p - dout))).astype(jnp.float32)
    bp = _pad_last(b.reshape(1, -1), dout_p).astype(jnp.float32)

    tm = _pick_tm(n, tm_cap)
    xp = _pad_rows(x, tm)
    np_ = xp.shape[0]

    out = pl.pallas_call(
        _proj_norm_kernel,
        out_shape=jax.ShapeDtypeStruct((np_, dout_p), jnp.float32),
        grid_spec=pltpu.PrefetchScalarGridSpec(
            num_scalar_prefetch=0,
            grid=(np_ // tm,),
            in_specs=[
                pl.BlockSpec((tm, dinp), lambda i: (i, 0)),
                pl.BlockSpec((dinp, dout_p), lambda i: (0, 0)),
                pl.BlockSpec((1, dout_p), lambda i: (0, 0)),
            ],
            out_specs=pl.BlockSpec((tm, dout_p), lambda i: (i, 0)),
        ),
        compiler_params=_cparams(("parallel",)),
    )(xp, wp, bp)
    return out[:n, :dout]


def _fused_dec_kernel(qloc_ref, qrec_ref, kin_ref, mem_ref, mask_ref,
                      wql_ref, bql_ref, wqr_ref, bqr_ref,
                      wk2_ref, bk2_ref, wv2_ref, bv2_ref,
                      wol_ref, bol_ref, wor_ref, bor_ref,
                      sw1_ref, sb1_ref, sw2_ref, sb2_ref, sw3_ref, sb3_ref,
                      ww1_ref, wb1_ref, ww2_ref, wb2_ref, ww3_ref, wb3_ref,
                      spans_ref, words_ref, attn_ref, *, h_true, hp):
    """Fused loc + rec single-head cross-attention decoders, one batch element
    per grid step.  K/V memory streams are shared: one wide [D, 2*Hp] matmul
    per stream serves both decoders.  The span / word MLP heads are applied in
    the epilogue on VMEM-resident activations.  All dims are padded to the
    128-lane grid with zero weights/bias, so padded columns stay exactly zero.

    TODO(synk): for long videos switch to an Lv-tiled online-softmax and block
    several batch elements per grid step; full [Nq, Lv] attn is kept because
    pred_attn is a module output.
    """
    scale = 1.0 / math.sqrt(h_true)
    mask = mask_ref[0]                                                # [1, Lv_p]

    # shared K/V memory streams (one wide matmul each, both decoders)
    k2 = jnp.dot(kin_ref[0], wk2_ref[...],
                 preferred_element_type=jnp.float32) + bk2_ref[...]   # [Lv_p, 2Hp]
    v2 = jnp.dot(mem_ref[0], wv2_ref[...],
                 preferred_element_type=jnp.float32) + bv2_ref[...]   # [Lv_p, 2Hp]

    def attend(q_in, wq_ref, bq_ref, k, v):
        q = jnp.dot(q_in, wq_ref[...],
                    preferred_element_type=jnp.float32) + bq_ref[...]  # [Nq, Hp]
        s = jax.lax.dot_general(q.astype(jnp.bfloat16), k.astype(jnp.bfloat16),
                                (((1,), (1,)), ((), ())),
                                preferred_element_type=jnp.float32) * scale
        s = jnp.where(mask > 0, s, -1e30)
        s = s - jnp.max(s, axis=-1, keepdims=True)
        p = jnp.exp(s)
        # exact softmax (pred_attn may feed a loss) + zero-length guard
        denom = jnp.maximum(jnp.sum(p, axis=-1, keepdims=True), 1e-30)
        a = p / denom
        o = jnp.dot(a.astype(jnp.bfloat16), v.astype(jnp.bfloat16),
                    preferred_element_type=jnp.float32)                # [Nq, Hp]
        return a, o

    a_loc, o_loc = attend(qloc_ref[0], wql_ref, bql_ref, k2[:, :hp], v2[:, :hp])
    _a_rec, o_rec = attend(qrec_ref[0], wqr_ref, bqr_ref, k2[:, hp:], v2[:, hp:])

    hs_loc = jnp.dot(o_loc.astype(jnp.bfloat16), wol_ref[...],
                     preferred_element_type=jnp.float32) + bol_ref[...]
    hs_rec = jnp.dot(o_rec.astype(jnp.bfloat16), wor_ref[...],
                     preferred_element_type=jnp.float32) + bor_ref[...]

    def head(x, w1, b1, w2, b2, w3, b3):
        hh = jnp.maximum(jnp.dot(x.astype(jnp.bfloat16), w1[...],
                                 preferred_element_type=jnp.float32) + b1[...], 0.0)
        hh = jnp.maximum(jnp.dot(hh.astype(jnp.bfloat16), w2[...],
                                 preferred_element_type=jnp.float32) + b2[...], 0.0)
        return jnp.dot(hh.astype(jnp.bfloat16), w3[...],
                       preferred_element_type=jnp.float32) + b3[...]

    spans = jax.nn.sigmoid(head(hs_loc, sw1_ref, sb1_ref, sw2_ref, sb2_ref,
                                sw3_ref, sb3_ref))
    words = head(hs_rec, ww1_ref, wb1_ref, ww2_ref, wb2_ref, ww3_ref, wb3_ref)

    spans_ref[0] = spans.astype(spans_ref.dtype)
    words_ref[0] = words.astype(words_ref.dtype)
    attn_ref[0] = a_loc.astype(attn_ref.dtype)


def fused_decoders(q_loc, q_rec, kin, mem, mem_mask,
                   loc_p, rec_p, span_p, word_p, *, h_true, span_dim, word_dim):
    """q_loc:[B,Nq,Dp] bf16 (query+pos), q_rec:[B,Lt,Dp] bf16, kin/mem:[B,Lv,Dp]
    bf16 (memory +/- pos), mem_mask:[B,Lv].  Returns sliced final outputs."""
    b, nq, dp = q_loc.shape
    lt = q_rec.shape[1]
    lv = mem.shape[1]
    nq_p = _round_up(nq, 16)
    lt_p = _round_up(lt, 16)
    lv_p = _round_up(lv, 128)
    sp_p = _round_up(span_dim, 128)
    wp_p = _round_up(word_dim, 128)

    def pad_rows3(x, to):
        return jnp.pad(x, ((0, 0), (0, to - x.shape[1]), (0, 0)))

    qlp = pad_rows3(q_loc, nq_p)
    qrp = pad_rows3(q_rec, lt_p)
    kinp = pad_rows3(kin, lv_p)
    memp = pad_rows3(mem, lv_p)
    mask3 = jnp.pad(mem_mask.astype(jnp.float32)[:, None, :],
                    ((0, 0), (0, 0), (0, lv_p - lv)))

    def padw(w, cols=dp):
        return jnp.pad(w, ((0, dp - w.shape[0]),
                           (0, cols - w.shape[1]))).astype(jnp.bfloat16)

    def padb(bv, cols=dp):
        return jnp.pad(bv.reshape(1, -1),
                       ((0, 0), (0, cols - bv.shape[0]))).astype(jnp.float32)

    wq_l, bq_l, wk_l, bk_l, wv_l, bv_l, wo_l, bo_l = loc_p
    wq_r, bq_r, wk_r, bk_r, wv_r, bv_r, wo_r, bo_r = rec_p
    sw1, sb1, sw2, sb2, sw3, sb3 = span_p
    ww1, wb1, ww2, wb2, ww3, wb3 = word_p

    # concatenated K / V projections for both decoders (one wide matmul each)
    wk2 = jnp.concatenate([padw(wk_l), padw(wk_r)], axis=1)        # [Dp, 2Dp]
    bk2 = jnp.concatenate([padb(bk_l), padb(bk_r)], axis=1)
    wv2 = jnp.concatenate([padw(wv_l), padw(wv_r)], axis=1)
    bv2 = jnp.concatenate([padb(bv_l), padb(bv_r)], axis=1)

    args = (qlp, qrp, kinp, memp, mask3,
            padw(wq_l), padb(bq_l), padw(wq_r), padb(bq_r),
            wk2, bk2, wv2, bv2,
            padw(wo_l), padb(bo_l), padw(wo_r), padb(bo_r),
            padw(sw1), padb(sb1), padw(sw2), padb(sb2),
            padw(sw3, cols=sp_p), padb(sb3, cols=sp_p),
            padw(ww1), padb(wb1), padw(ww2), padb(wb2),
            padw(ww3, cols=wp_p), padb(wb3, cols=wp_p))

    in_specs = [
        pl.BlockSpec((1, nq_p, dp), lambda i: (i, 0, 0)),
        pl.BlockSpec((1, lt_p, dp), lambda i: (i, 0, 0)),
        pl.BlockSpec((1, lv_p, dp), lambda i: (i, 0, 0)),
        pl.BlockSpec((1, lv_p, dp), lambda i: (i, 0, 0)),
        pl.BlockSpec((1, 1, lv_p), lambda i: (i, 0, 0)),
    ]
    for a in args[5:]:
        in_specs.append(pl.BlockSpec(a.shape, lambda i: (0, 0)))

    spans, words, attn = pl.pallas_call(
        functools.partial(_fused_dec_kernel, h_true=h_true, hp=dp),
        out_shape=(jax.ShapeDtypeStruct((b, nq_p, sp_p), jnp.float32),
                   jax.ShapeDtypeStruct((b, lt_p, wp_p), jnp.float32),
                   jax.ShapeDtypeStruct((b, nq_p, lv_p), jnp.float32)),
        grid_spec=pltpu.PrefetchScalarGridSpec(
            num_scalar_prefetch=0,
            grid=(b,),
            in_specs=in_specs,
            out_specs=[pl.BlockSpec((1, nq_p, sp_p), lambda i: (i, 0, 0)),
                       pl.BlockSpec((1, lt_p, wp_p), lambda i: (i, 0, 0)),
                       pl.BlockSpec((1, nq_p, lv_p), lambda i: (i, 0, 0))],
        ),
        compiler_params=_cparams(("parallel",)),
    )(*args)

    return (spans[:, :nq, :span_dim],
            words[:, :lt, :word_dim],
            attn[:, :nq, :lv])


# ----------------------------------------------------------------------------
# Plain-JAX glue (GRU text encoder, sine position embedding, masks)
# ----------------------------------------------------------------------------
def get_mask_from_sequence_lengths(lengths, max_length):
    rng = jnp.arange(1, max_length + 1, dtype=lengths.dtype)
    return (lengths[:, None] >= rng[None, :]).astype(jnp.int32)


def _gru_scan(x_t, valid_t, params, hidden, reverse):
    """x_t:[T,N,Din], valid_t:[T,N,1] -> outputs [T,N,hidden] (zeros at pad).

    The input GEMM is hoisted out of the scan (one [T*N,Din]x[Din,3H] matmul);
    only the recurrent h @ W_hh^T stays serialized.
    """
    w_ih, w_hh, b_ih, b_hh = params
    n = x_t.shape[1]
    h0 = jnp.zeros((n, hidden), jnp.float32)
    gi_all = jnp.einsum('tnd,hd->tnh', x_t, w_ih) + b_ih          # [T,N,3H]

    def step(h, inp):
        gi, vt = inp
        gh = h @ w_hh.T + b_hh
        i_r, i_z, i_n = jnp.split(gi, 3, axis=-1)
        h_r, h_z, h_n = jnp.split(gh, 3, axis=-1)
        r = jax.nn.sigmoid(i_r + h_r)
        z = jax.nn.sigmoid(i_z + h_z)
        ng = jnp.tanh(i_n + r * h_n)
        h_new = (1.0 - z) * ng + z * h
        h = jnp.where(vt > 0, h_new, h)
        return h, h * vt

    _, outs = jax.lax.scan(step, h0, (gi_all, valid_t), reverse=reverse)
    return outs


def _bigru_layer(x, lengths, fwd, bwd, hidden):
    n, t, _ = x.shape
    valid = (jnp.arange(t)[None, :] < lengths[:, None]).astype(jnp.float32)
    x_t = jnp.swapaxes(x, 0, 1)
    v_t = jnp.swapaxes(valid, 0, 1)[:, :, None]
    f = _gru_scan(x_t, v_t, fwd, hidden, reverse=False)
    b = _gru_scan(x_t, v_t, bwd, hidden, reverse=True)
    return jnp.swapaxes(jnp.concatenate([f, b], axis=-1), 0, 1)


def text_encoder(tokens, lengths, params, hidden):
    # TODO(synk): packed-sequence bidirectional GRU has no clean Pallas
    # equivalent; emulated with lax.scan (padded steps emit zeros, matching
    # pack_padded_sequence/pad_packed_sequence eval-mode behavior).
    x = tokens
    for layer in range(2):
        x = _bigru_layer(x, lengths, params[f'l{layer}_fwd'],
                         params[f'l{layer}_bwd'], hidden)
    word_level = x
    hh = word_level.shape[-1]
    sentence_level = jnp.concatenate(
        [word_level[:, -1, :hh // 2], word_level[:, 0, hh // 2:]], axis=-1)
    return sentence_level, word_level


def sine_pos_embed(mask, num_pos_feats, temperature=10000.0):
    # TODO(synk): original PositionEmbeddingSine / position_embed modules not
    # provided; this is the standard DETR-style 1-D sine embedding stand-in.
    scale = 2.0 * math.pi
    x_embed = jnp.cumsum(mask.astype(jnp.float32), axis=1)
    x_embed = x_embed / (x_embed[:, -1:] + 1e-6) * scale
    dim_t = temperature ** (2.0 * (jnp.arange(num_pos_feats) // 2) / num_pos_feats)
    pos_x = x_embed[:, :, None] / dim_t
    pos = jnp.stack([jnp.sin(pos_x[:, :, 0::2]), jnp.cos(pos_x[:, :, 1::2])],
                    axis=3).reshape(mask.shape[0], mask.shape[1], -1)
    return pos.astype(jnp.float32)


# ----------------------------------------------------------------------------
# Parameter init (deterministic, synthetic)
# ----------------------------------------------------------------------------
def init_params(key, cfg):
    keys = iter(jax.random.split(key, 128))
    nk = lambda: next(keys)
    H = cfg['hidden_dim']

    def dense(din, dout):
        return (jax.random.normal(nk(), (din, dout), jnp.float32) * 0.05,
                jax.random.normal(nk(), (dout,), jnp.float32) * 0.01)

    def linear_layer_params(din, dout, relu):
        w, b = dense(din, dout)
        return (jnp.ones((din,), jnp.float32), jnp.zeros((din,), jnp.float32),
                w, b, relu)

    def gru_dir(din, hidden):
        s = 1.0 / math.sqrt(hidden)
        u = lambda shape: jax.random.uniform(nk(), shape, jnp.float32, -s, s)
        return (u((3 * hidden, din)), u((3 * hidden, hidden)),
                u((3 * hidden,)), u((3 * hidden,)))

    gru_h = cfg['dec_query_idim'] // 2
    text_enc = {
        'l0_fwd': gru_dir(cfg['sent_emb_dim'], gru_h),
        'l0_bwd': gru_dir(cfg['sent_emb_dim'], gru_h),
        'l1_fwd': gru_dir(2 * gru_h, gru_h),
        'l1_bwd': gru_dir(2 * gru_h, gru_h),
    }

    def mlp3_params(din, hid, dout):
        w1, b1 = dense(din, hid)
        w2, b2 = dense(hid, hid)
        w3, b3 = dense(hid, dout)
        return (w1, b1, w2, b2, w3, b3)

    def attn_params(h):
        ps = []
        for _ in range(4):
            w, b = dense(h, h)
            ps += [w, b]
        return tuple(ps)

    # n_input_proj = 2 -> relu flags [True, False]
    return {
        'hidden_dim': H,
        'text_encoder': text_enc,
        'input_vid_proj': [linear_layer_params(cfg['vid_dim'], H, True),
                           linear_layer_params(H, H, False)],
        'input_txt_proj': [linear_layer_params(cfg['txt_dim'], H, True),
                           linear_layer_params(H, H, False)],
        'span_embed': mlp3_params(H, H, 2),            # span_loss_type == 'l1'
        'word_predict': mlp3_params(H, H, cfg['word_pred_dim']),
        'loc_decoder': attn_params(H),
        'rec_decoder': attn_params(H),
        'contrastive_txt': dense(H, cfg['contrastive_hdim']),
        'contrastive_vid': dense(H, cfg['contrastive_hdim']),
    }


# ----------------------------------------------------------------------------
# GTLR forward
# ----------------------------------------------------------------------------
def gtlr_forward(params, net_inps, proposal_num_list, cfg):
    H = params['hidden_dim']               # assumes dec_query_idim == hidden_dim
    Dp = _round_up(H, 128)                 # lane-padded feature dim carried end-to-end

    enc_vid = net_inps['videoFeat']
    enc_vid_mask = get_mask_from_sequence_lengths(
        net_inps['videoFeat_lengths'], int(enc_vid.shape[1]))
    enc_text = net_inps['textEmbedding']
    enc_text_mask = get_mask_from_sequence_lengths(
        net_inps['textEmbedding_lengths'], int(enc_text.shape[1]))
    del enc_text_mask  # use_txt_pos = False -> only kept to mirror the module

    dec_sentence, _rec_words = text_encoder(
        net_inps['sentences_emb'], net_inps['sentences_lengths'],
        params['text_encoder'], cfg['dec_query_idim'] // 2)

    # split/pad per-batch proposals (rnns.pad_sequence equivalent)
    nq = max(proposal_num_list)
    chunks, off = [], 0
    for n in proposal_num_list:
        c = dec_sentence[off:off + n]
        chunks.append(jnp.pad(c, ((0, nq - n), (0, 0))))
        off += n
    batch_dec_query = jnp.stack(chunks, axis=0)                  # [B, Nq, idim]
    batch_dec_mask = get_mask_from_sequence_lengths(
        jnp.array(proposal_num_list, jnp.int32), nq)

    # fused 2-layer input projections (Pallas) -> bf16, 128-lane padded layout
    def run_proj(x, proj):
        b, l, d = x.shape
        h = input_proj2(x.reshape(b * l, d), proj[0], proj[1], dout_pad=Dp)
        return h.reshape(b, l, Dp)

    src_vid_p = run_proj(enc_vid, params['input_vid_proj'])      # [B, Lv, Dp] bf16
    src_txt_p = run_proj(enc_text, params['input_txt_proj'])     # [B, Lt, Dp] bf16

    dec_pos = _pad_last(sine_pos_embed(batch_dec_mask, H), Dp)
    pos_vid = _pad_last(sine_pos_embed(enc_vid_mask, H), Dp)
    # pos_txt = zeros (use_txt_pos = False) -> rec query is src_txt itself

    q_loc = (_pad_last(batch_dec_query, Dp) + dec_pos).astype(jnp.bfloat16)
    q_rec = src_txt_p
    kin = (src_vid_p.astype(jnp.float32) + pos_vid).astype(jnp.bfloat16)

    # TODO(synk): the real GTLR transformer module is an external dependency
    # not provided; stand-in: fused single-head cross-attention decoders with
    # the span/word MLP heads applied in the kernel epilogue (Pallas).
    spans, words, attn = fused_decoders(
        q_loc, q_rec, kin, src_vid_p, enc_vid_mask,
        params['loc_decoder'], params['rec_decoder'],
        params['span_embed'], params['word_predict'],
        h_true=H, span_dim=2, word_dim=cfg['word_pred_dim'])

    out = {'pred_spans': spans,                      # [B, Nq, 2] (sigmoid, 'l1')
           'pred_mask': batch_dec_mask,
           'pred_attn': attn[None],                  # [1, B, Nq, Lv]
           'pred_words': words}                      # [B, Lt, word_pred_dim]

    # TODO(synk): txt_mem / vid_mem are undefined in the reference forward
    # (upstream bug); using projected inputs src_txt / src_vid as the memories.
    b = enc_vid.shape[0]
    lv = enc_vid.shape[1]
    lt = enc_text.shape[1]
    proj_txt_mem = proj_norm(src_txt_p.reshape(b * lt, Dp),
                             params['contrastive_txt']).reshape(b, lt, -1)
    proj_vid_mem = proj_norm(src_vid_p.reshape(b * lv, Dp),
                             params['contrastive_vid']).reshape(b, lv, -1)
    out.update(dict(proj_txt_mem=proj_txt_mem, proj_vid_mem=proj_vid_mem))
    return out


# ----------------------------------------------------------------------------
if __name__ == "__main__":
    cfg = dict(hidden_dim=32, txt_dim=48, vid_dim=64, dec_query_idim=32,
               word_pred_dim=50, contrastive_hdim=16, sent_emb_dim=300)

    key = jax.random.PRNGKey(0)
    kp, kd = jax.random.split(key)
    params = init_params(kp, cfg)

    B, Lv, Lt, Ls = 2, 16, 8, 6
    total_props = 5
    dkeys = jax.random.split(kd, 4)
    net_inps = {
        'videoFeat': jax.random.normal(dkeys[0], (B, Lv, cfg['vid_dim']), jnp.float32),
        'videoFeat_lengths': jnp.array([16, 12], jnp.int32),
        'textEmbedding': jax.random.normal(dkeys[1], (B, Lt, cfg['txt_dim']), jnp.float32),
        'textEmbedding_lengths': jnp.array([8, 5], jnp.int32),
        'sentences_emb': jax.random.normal(dkeys[2], (total_props, Ls, cfg['sent_emb_dim']),
                                           jnp.float32),
        'sentences_lengths': jnp.array([6, 4, 5, 3, 6], jnp.int32),
    }
    proposal_num_list = [3, 2]   # sums to total_props

    out = gtlr_forward(params, net_inps, proposal_num_list, cfg)
    out = jax.tree_util.tree_map(jax.block_until_ready, out)

    assert out['pred_spans'].shape == (B, 3, 2)
    assert out['pred_words'].shape == (B, Lt, cfg['word_pred_dim'])
    assert out['pred_attn'].shape == (1, B, 3, Lv)
    assert out['proj_txt_mem'].shape == (B, Lt, cfg['contrastive_hdim'])
    assert out['proj_vid_mem'].shape == (B, Lv, cfg['contrastive_hdim'])
    assert bool(jnp.all(jnp.isfinite(out['pred_spans'])))
    assert bool(jnp.all(jnp.isfinite(out['pred_attn'])))
    print("KERNEL_OK")
</pallas_src>

<mosaic_0001>
module attributes {stable_mosaic.version = 11 : i64} {
  func.func @_proj2_kernel(%arg0: i32, %arg1: memref<32x64xbf16, #tpu.memory_space<vmem>>, %arg2: memref<1x64xf32, #tpu.memory_space<vmem>>, %arg3: memref<1x64xf32, #tpu.memory_space<vmem>>, %arg4: memref<64x32xbf16, #tpu.memory_space<vmem>>, %arg5: memref<1x32xf32, #tpu.memory_space<vmem>>, %arg6: memref<1x32xf32, #tpu.memory_space<vmem>>, %arg7: memref<1x32xf32, #tpu.memory_space<vmem>>, %arg8: memref<32x128xbf16, #tpu.memory_space<vmem>>, %arg9: memref<1x128xf32, #tpu.memory_space<vmem>>, %arg10: memref<32x128xbf16, #tpu.memory_space<vmem>>) attributes {dimension_semantics = [#tpu.dimension_semantics<parallel>], iteration_bounds = array<i64: 1>, scalar_prefetch = 0 : i64, scratch_operands = 0 : i64, tpu.core_type = #tpu.core_type<tc>, window_params = [{transform_indices = @transform_0, window_bounds = array<i64: 32, 64>}, {pipeline_mode = #tpu.pipeline_mode<synchronous>, transform_indices = @transform_1, window_bounds = array<i64: 1, 64>}, {pipeline_mode = #tpu.pipeline_mode<synchronous>, transform_indices = @transform_2, window_bounds = array<i64: 1, 64>}, {pipeline_mode = #tpu.pipeline_mode<synchronous>, transform_indices = @transform_3, window_bounds = array<i64: 64, 32>}, {pipeline_mode = #tpu.pipeline_mode<synchronous>, transform_indices = @transform_4, window_bounds = array<i64: 1, 32>}, {pipeline_mode = #tpu.pipeline_mode<synchronous>, transform_indices = @transform_5, window_bounds = array<i64: 1, 32>}, {pipeline_mode = #tpu.pipeline_mode<synchronous>, transform_indices = @transform_6, window_bounds = array<i64: 1, 32>}, {pipeline_mode = #tpu.pipeline_mode<synchronous>, transform_indices = @transform_7, window_bounds = array<i64: 32, 128>}, {pipeline_mode = #tpu.pipeline_mode<synchronous>, transform_indices = @transform_8, window_bounds = array<i64: 1, 128>}, {transform_indices = @transform_9, window_bounds = array<i64: 32, 128>}]} {
    %c0 = arith.constant 0 : index
    %c0_0 = arith.constant 0 : index
    %0 = vector.load %arg1[%c0, %c0_0] : memref<32x64xbf16, #tpu.memory_space<vmem>>, vector<32x64xbf16>
    %1 = arith.extf %0 : vector<32x64xbf16> to vector<32x64xf32>
    %cst = arith.constant dense<0.000000e+00> : vector<32xf32>
    %2 = vector.multi_reduction <add>, %1, %cst [1] : vector<32x64xf32> to vector<32xf32>
    %3 = vector.shape_cast %2 : vector<32xf32> to vector<32x1xf32>
    %cst_1 = arith.constant 6.400000e+01 : f32
    %4 = vector.broadcast %cst_1 : f32 to vector<32x1xf32>
    %5 = arith.divf %3, %4 : vector<32x1xf32>
    %6 = vector.broadcast %5 : vector<32x1xf32> to vector<32x64xf32>
    %7 = arith.subf %1, %6 : vector<32x64xf32>
    %8 = arith.mulf %7, %7 : vector<32x64xf32>
    %cst_2 = arith.constant dense<0.000000e+00> : vector<32xf32>
    %9 = vector.multi_reduction <add>, %8, %cst_2 [1] : vector<32x64xf32> to vector<32xf32>
    %10 = vector.shape_cast %9 : vector<32xf32> to vector<32x1xf32>
    %cst_3 = arith.constant 6.400000e+01 : f32
    %11 = vector.broadcast %cst_3 : f32 to vector<32x1xf32>
    %12 = arith.divf %10, %11 : vector<32x1xf32>
    %13 = vector.broadcast %5 : vector<32x1xf32> to vector<32x64xf32>
    %14 = arith.subf %1, %13 : vector<32x64xf32>
    %cst_4 = arith.constant 9.99999974E-6 : f32
    %15 = vector.broadcast %cst_4 : f32 to vector<32x1xf32>
    %16 = arith.addf %12, %15 : vector<32x1xf32>
    %17 = math.rsqrt %16 : vector<32x1xf32>
    %18 = vector.broadcast %17 : vector<32x1xf32> to vector<32x64xf32>
    %19 = arith.mulf %14, %18 : vector<32x64xf32>
    %c0_5 = arith.constant 0 : index
    %c0_6 = arith.constant 0 : index
    %20 = vector.load %arg2[%c0_5, %c0_6] : memref<1x64xf32, #tpu.memory_space<vmem>>, vector<1x64xf32>
    %21 = vector.broadcast %20 : vector<1x64xf32> to vector<32x64xf32>
    %22 = arith.mulf %19, %21 : vector<32x64xf32>
    %c0_7 = arith.constant 0 : index
    %c0_8 = arith.constant 0 : index
    %23 = vector.load %arg3[%c0_7, %c0_8] : memref<1x64xf32, #tpu.memory_space<vmem>>, vector<1x64xf32>
    %24 = vector.broadcast %23 : vector<1x64xf32> to vector<32x64xf32>
    %25 = arith.addf %22, %24 : vector<32x64xf32>
    %26 = arith.truncf %25 : vector<32x64xf32> to vector<32x64xbf16>
    %c0_9 = arith.constant 0 : index
    %c0_10 = arith.constant 0 : index
    %27 = vector.load %arg4[%c0_9, %c0_10] : memref<64x32xbf16, #tpu.memory_space<vmem>>, vector<64x32xbf16>
    %cst_11 = arith.constant dense<0.000000e+00> : vector<32x32xf32>
    %28 = tpu.matmul %26, %27, %cst_11 {dimension_numbers = #tpu.dot_dimension_numbers<[1], [0], [0], [1], [0, 0, 1, 1], [], []>} : vector<32x64xbf16>, vector<64x32xbf16>, vector<32x32xf32> -> vector<32x32xf32>
    %c0_12 = arith.constant 0 : index
    %c0_13 = arith.constant 0 : index
    %29 = vector.load %arg5[%c0_12, %c0_13] : memref<1x32xf32, #tpu.memory_space<vmem>>, vector<1x32xf32>
    %30 = vector.broadcast %29 : vector<1x32xf32> to vector<32x32xf32>
    %31 = arith.addf %28, %30 : vector<32x32xf32>
    %cst_14 = arith.constant 0.000000e+00 : f32
    %32 = vector.broadcast %cst_14 : f32 to vector<32x32xf32>
    %33 = arith.maximumf %31, %32 : vector<32x32xf32>
    %cst_15 = arith.constant dense<0.000000e+00> : vector<32xf32>
    %34 = vector.multi_reduction <add>, %33, %cst_15 [1] : vector<32x32xf32> to vector<32xf32>
    %35 = vector.shape_cast %34 : vector<32xf32> to vector<32x1xf32>
    %cst_16 = arith.constant 3.200000e+01 : f32
    %36 = vector.broadcast %cst_16 : f32 to vector<32x1xf32>
    %37 = arith.divf %35, %36 : vector<32x1xf32>
    %38 = vector.broadcast %37 : vector<32x1xf32> to vector<32x32xf32>
    %39 = arith.subf %33, %38 : vector<32x32xf32>
    %40 = arith.mulf %39, %39 : vector<32x32xf32>
    %cst_17 = arith.constant dense<0.000000e+00> : vector<32xf32>
    %41 = vector.multi_reduction <add>, %40, %cst_17 [1] : vector<32x32xf32> to vector<32xf32>
    %42 = vector.shape_cast %41 : vector<32xf32> to vector<32x1xf32>
    %cst_18 = arith.constant 3.200000e+01 : f32
    %43 = vector.broadcast %cst_18 : f32 to vector<32x1xf32>
    %44 = arith.divf %42, %43 : vector<32x1xf32>
    %45 = vector.broadcast %37 : vector<32x1xf32> to vector<32x32xf32>
    %46 = arith.subf %33, %45 : vector<32x32xf32>
    %cst_19 = arith.constant 9.99999974E-6 : f32
    %47 = vector.broadcast %cst_19 : f32 to vector<32x1xf32>
    %48 = arith.addf %44, %47 : vector<32x1xf32>
    %49 = math.rsqrt %48 : vector<32x1xf32>
    %50 = vector.broadcast %49 : vector<32x1xf32> to vector<32x32xf32>
    %51 = arith.mulf %46, %50 : vector<32x32xf32>
    %c0_20 = arith.constant 0 : index
    %c0_21 = arith.constant 0 : index
    %52 = vector.load %arg6[%c0_20, %c0_21] : memref<1x32xf32, #tpu.memory_space<vmem>>, vector<1x32xf32>
    %53 = vector.broadcast %52 : vector<1x32xf32> to vector<32x32xf32>
    %54 = arith.mulf %51, %53 : vector<32x32xf32>
    %c0_22 = arith.constant 0 : index
    %c0_23 = arith.constant 0 : index
    %55 = vector.load %arg7[%c0_22, %c0_23] : memref<1x32xf32, #tpu.memory_space<vmem>>, vector<1x32xf32>
    %56 = vector.broadcast %55 : vector<1x32xf32> to vector<32x32xf32>
    %57 = arith.addf %54, %56 : vector<32x32xf32>
    %58 = arith.truncf %57 : vector<32x32xf32> to vector<32x32xbf16>
    %c0_24 = arith.constant 0 : index
    %c0_25 = arith.constant 0 : index
    %59 = vector.load %arg8[%c0_24, %c0_25] : memref<32x128xbf16, #tpu.memory_space<vmem>>, vector<32x128xbf16>
    %cst_26 = arith.constant dense<0.000000e+00> : vector<32x128xf32>
    %60 = tpu.matmul %58, %59, %cst_26 {dimension_numbers = #tpu.dot_dimension_numbers<[1], [0], [0], [1], [0, 0, 1, 1], [], []>} : vector<32x32xbf16>, vector<32x128xbf16>, vector<32x128xf32> -> vector<32x128xf32>
    %c0_27 = arith.constant 0 : index
    %c0_28 = arith.constant 0 : index
    %61 = vector.load %arg9[%c0_27, %c0_28] : memref<1x128xf32, #tpu.memory_space<vmem>>, vector<1x128xf32>
    %62 = vector.broadcast %61 : vector<1x128xf32> to vector<32x128xf32>
    %63 = arith.addf %60, %62 : vector<32x128xf32>
    %64 = arith.truncf %63 : vector<32x128xf32> to vector<32x128xbf16>
    %c0_29 = arith.constant 0 : index
    %c0_30 = arith.constant 0 : index
    %65 = vector.load %arg10[%c0_29, %c0_30] : memref<32x128xbf16, #tpu.memory_space<vmem>>, vector<32x128xbf16>
    tpu.vector_store %arg10[%c0_29, %c0_30], %64 {strides = array<i32>} : memref<32x128xbf16, #tpu.memory_space<vmem>>, vector<32x128xbf16>,
    return
  }
  func.func @transform_0(%arg0: i32) -> (i32, i32) {
    %c0_i32 = arith.constant 0 : i32
    %c0_i32_0 = arith.constant 0 : i32
    return %arg0, %c0_i32 : i32, i32
  }
  func.func @transform_1(%arg0: i32) -> (i32, i32) {
    %c0_i32 = arith.constant 0 : i32
    %c0_i32_0 = arith.constant 0 : i32
    %c0_i32_1 = arith.constant 0 : i32
    return %c0_i32, %c0_i32_0 : i32, i32
  }
  func.func @transform_2(%arg0: i32) -> (i32, i32) {
    %c0_i32 = arith.constant 0 : i32
    %c0_i32_0 = arith.constant 0 : i32
    %c0_i32_1 = arith.constant 0 : i32
    return %c0_i32, %c0_i32_0 : i32, i32
  }
  func.func @transform_3(%arg0: i32) -> (i32, i32) {
    %c0_i32 = arith.constant 0 : i32
    %c0_i32_0 = arith.constant 0 : i32
    %c0_i32_1 = arith.constant 0 : i32
    return %c0_i32, %c0_i32_0 : i32, i32
  }
  func.func @transform_4(%arg0: i32) -> (i32, i32) {
    %c0_i32 = arith.constant 0 : i32
    %c0_i32_0 = arith.constant 0 : i32
    %c0_i32_1 = arith.constant 0 : i32
    return %c0_i32, %c0_i32_0 : i32, i32
  }
  func.func @transform_5(%arg0: i32) -> (i32, i32) {
    %c0_i32 = arith.constant 0 : i32
    %c0_i32_0 = arith.constant 0 : i32
    %c0_i32_1 = arith.constant 0 : i32
    return %c0_i32, %c0_i32_0 : i32, i32
  }
  func.func @transform_6(%arg0: i32) -> (i32, i32) {
    %c0_i32 = arith.constant 0 : i32
    %c0_i32_0 = arith.constant 0 : i32
    %c0_i32_1 = arith.constant 0 : i32
    return %c0_i32, %c0_i32_0 : i32, i32
  }
  func.func @transform_7(%arg0: i32) -> (i32, i32) {
    %c0_i32 = arith.constant 0 : i32
    %c0_i32_0 = arith.constant 0 : i32
    %c0_i32_1 = arith.constant 0 : i32
    return %c0_i32, %c0_i32_0 : i32, i32
  }
  func.func @transform_8(%arg0: i32) -> (i32, i32) {
    %c0_i32 = arith.constant 0 : i32
    %c0_i32_0 = arith.constant 0 : i32
    %c0_i32_1 = arith.constant 0 : i32
    return %c0_i32, %c0_i32_0 : i32, i32
  }
  func.func @transform_9(%arg0: i32) -> (i32, i32) {
    %c0_i32 = arith.constant 0 : i32
    %c0_i32_0 = arith.constant 0 : i32
    return %arg0, %c0_i32 : i32, i32
  }
}

</mosaic_0001>

<llo_original>
// kernel: tpu_custom_call.1
$region0: #{tpu_custom_call.1}
  #allocation0 [shape = 'u32[]', space=smem, size = 0x4, offset = 0x4, fixed_abs, tag = 'smem constant byte address 0x4 - core index']
  #allocation1 [shape = 'u32[144,128]{1,0:T(1,128)}', space=vmem, size = 0x12000, scoped, tag = 'internal scratch']
  %s0 = inlined_call_operand.vmem [shape: bf16[32,64], index: 0, kind: input, shape index: {}]
  %s1 = inlined_call_operand.vmem [shape: f32[1,64], index: 1, kind: input, shape index: {}]
  %s2 = inlined_call_operand.vmem [shape: f32[1,64], index: 2, kind: input, shape index: {}]
  %s3 = inlined_call_operand.vmem [shape: bf16[64,32], index: 3, kind: input, shape index: {}]
  %s4 = inlined_call_operand.vmem [shape: f32[1,32], index: 4, kind: input, shape index: {}]
  %s5 = inlined_call_operand.vmem [shape: f32[1,32], index: 5, kind: input, shape index: {}]
  %s6 = inlined_call_operand.vmem [shape: f32[1,32], index: 6, kind: input, shape index: {}]
  %s7 = inlined_call_operand.vmem [shape: bf16[32,128], index: 7, kind: input, shape index: {}]
  %s8 = inlined_call_operand.vmem [shape: f32[1,128], index: 8, kind: input, shape index: {}]
  %s9 = inlined_call_operand.hbm [shape: bf16[32,128], index: 9, kind: output, shape index: {}]
  %s10 = sld [smem:[#allocation0]]
  $region46: #{tpu_custom_call.1} parent=0
    _
  %s12 = ssub.s32 1, %s10
  %s13 = scalar_select 0, %s12, %s10
  $region1: #{tpu_custom_call.1} parent=0
    #allocation2 [shape = 'u8[8192]{0}', space=vmem, size = 0x2000, scoped, tag = 'output window, operand 0, single buffered']
    #allocation3 [shape = 's32[1]{0}', space=sflag, size = 0x4, scoped, tag = 'scoped memory for tpu_custom_call.1']
    %14 = vsyncpa [#allocation3], 0
    // Predicated region
    $region2: #{tpu_custom_call.1} parent=1 // pred_check
      _
    $region3: #{tpu_custom_call.1} parent=1 // pred_check_branch
      %16 = sbr.rel (0) target = $region5
    $region4: #{tpu_custom_call.1} parent=1 // pred_region
      _
    $region5: #{tpu_custom_call.1} parent=1 // pred_fallthru
      _
    // Predicated region
    $region6: #{tpu_custom_call.1} parent=1 // pred_check
      _
    $region7: #{tpu_custom_call.1} parent=1 // pred_check_branch
      %18 = sbr.rel (0) target = $region9
    $region8: #{tpu_custom_call.1} parent=1 // pred_region
      _
    $region9: #{tpu_custom_call.1} parent=1 // pred_fallthru
      _
    // Predicated region
    $region10: #{tpu_custom_call.1} parent=1 // pred_check
      _
    $region11: #{tpu_custom_call.1} parent=1 // pred_check_branch
      %20 = sbr.rel (0) target = $region13
    $region12: #{tpu_custom_call.1} parent=1 // pred_region
      _
    $region13: #{tpu_custom_call.1} parent=1 // pred_fallthru
      _
    // Predicated region
    $region14: #{tpu_custom_call.1} parent=1 // pred_check
      _
    $region15: #{tpu_custom_call.1} parent=1 // pred_check_branch
      %22 = sbr.rel (0) target = $region17
    $region16: #{tpu_custom_call.1} parent=1 // pred_region
      _
    $region17: #{tpu_custom_call.1} parent=1 // pred_fallthru
      _
    // Predicated region
    $region18: #{tpu_custom_call.1} parent=1 // pred_check
      _
    $region19: #{tpu_custom_call.1} parent=1 // pred_check_branch
      %24 = sbr.rel (0) target = $region21
    $region20: #{tpu_custom_call.1} parent=1 // pred_region
      _
    $region21: #{tpu_custom_call.1} parent=1 // pred_fallthru
      _
    // Predicated region
    $region22: #{tpu_custom_call.1} parent=1 // pred_check
      _
    $region23: #{tpu_custom_call.1} parent=1 // pred_check_branch
      %26 = sbr.rel (0) target = $region25
    $region24: #{tpu_custom_call.1} parent=1 // pred_region
      _
    $region25: #{tpu_custom_call.1} parent=1 // pred_fallthru
      _
    // Predicated region
    $region26: #{tpu_custom_call.1} parent=1 // pred_check
      _
    $region27: #{tpu_custom_call.1} parent=1 // pred_check_branch
      %28 = sbr.rel (0) target = $region29
    $region28: #{tpu_custom_call.1} parent=1 // pred_region
      _
    $region29: #{tpu_custom_call.1} parent=1 // pred_fallthru
      _
    // Predicated region
    $region30: #{tpu_custom_call.1} parent=1 // pred_check
      _
    $region31: #{tpu_custom_call.1} parent=1 // pred_check_branch
      %30 = sbr.rel (0) target = $region33
    $region32: #{tpu_custom_call.1} parent=1 // pred_region
      _
    $region33: #{tpu_custom_call.1} parent=1 // pred_fallthru
      _
    // Predicated region
    $region34: #{tpu_custom_call.1} parent=1 // pred_check
      _
    $region35: #{tpu_custom_call.1} parent=1 // pred_check_branch
      %32 = sbr.rel (0) target = $region37
    $region36: #{tpu_custom_call.1} parent=1 // pred_region
      _
    $region37: #{tpu_custom_call.1} parent=1 // pred_fallthru
      _
    %v34 = vld [vmem:[%s0] sm:$0xf]
    %v35 = vld [vmem:[%s0 + $0x4] sm:$0xf]
    %v36 = vld [vmem:[%s0 + $0x8] sm:$0xf]
    %v37 = vld [vmem:[%s0 + $0xc] sm:$0xf]
    %v38 = vunpack.c.l.bf16 %v34
    %v39 = vunpack.c.l.bf16 %v35
    %v40 = vunpack.c.l.bf16 %v36
    %v41 = vunpack.c.l.bf16 %v37
    %vm42 = vcmask 523264
    %v43 = vsel %vm42, %v38, 0.0
    %44 = vadd.xlane.f32.xlu0 %v43
    %v45 = vpop.xlane.xlu0 %44
    %v46 = vsel %vm42, %v39, 0.0
    %47 = vadd.xlane.f32.xlu0 %v46
    %v48 = vpop.xlane.xlu0 %47
    %v49 = vsel %vm42, %v40, 0.0
    %50 = vadd.xlane.f32.xlu0 %v49
    %v51 = vpop.xlane.xlu0 %50
    %v52 = vsel %vm42, %v41, 0.0
    %53 = vadd.xlane.f32.xlu0 %v52
    %v54 = vpop.xlane.xlu0 %53
    %v55 = vrcp.pop 64.0
    %v56 = vmul.f32 %v45, %v55
    %v57 = vmul.f32 %v48, %v55
    %v58 = vmul.f32 %v51, %v55
    %v59 = vmul.f32 %v54, %v55
    %v60 = vsub.f32 %v38, %v56
    %v61 = vsub.f32 %v39, %v57
    %v62 = vsub.f32 %v40, %v58
    %v63 = vsub.f32 %v41, %v59
    %v64 = vmul.f32 %v60, %v60
    %v65 = vmul.f32 %v61, %v61
    %v66 = vmul.f32 %v62, %v62
    %v67 = vmul.f32 %v63, %v63
    %v68 = vsel %vm42, %v64, 0.0
    %69 = vadd.xlane.f32.xlu0 %v68
    %v70 = vpop.xlane.xlu0 %69
    %v71 = vsel %vm42, %v65, 0.0
    %72 = vadd.xlane.f32.xlu0 %v71
    %v73 = vpop.xlane.xlu0 %72
    %v74 = vsel %vm42, %v66, 0.0
    %75 = vadd.xlane.f32.xlu0 %v74
    %v76 = vpop.xlane.xlu0 %75
    %v77 = vsel %vm42, %v67, 0.0
    %78 = vadd.xlane.f32.xlu0 %v77
    %v79 = vpop.xlane.xlu0 %78
    %v80 = vmul.f32 %v70, %v55
    %v81 = vmul.f32 %v73, %v55
    %v82 = vmul.f32 %v76, %v55
    %v83 = vmul.f32 %v79, %v55
    %v84 = vadd.f32 %v80, 1e-05
    %v85 = vadd.f32 %v81, 1e-05
    %v86 = vadd.f32 %v82, 1e-05
    %v87 = vadd.f32 %v83, 1e-05
    %v88 = vrsqrt.pop %v84
    %v89 = vrsqrt.pop %v85
    %v90 = vrsqrt.pop %v86
    %v91 = vrsqrt.pop %v87
    %v92 = vmul.f32 %v60, %v88
    %v93 = vmul.f32 %v61, %v89
    %v94 = vmul.f32 %v62, %v90
    %v95 = vmul.f32 %v63, %v91
    %v96 = vld [vmem:[%s1] sm:$0x1]
    %v98 = vlaneseq
    %v99 = vshrl.u32 %v98, 7
    %v100 = vsub.s32 0, %v99
    %v101 = vrot.slane %v96, %v100
    %v103 = vmul.f32 %v92, %v101
    %v104 = vmul.f32 %v93, %v101
    %v105 = vmul.f32 %v94, %v101
    %v106 = vmul.f32 %v95, %v101
    %v107 = vld [vmem:[%s2] sm:$0x1]
    %v109 = vlaneseq
    %v110 = vshrl.u32 %v109, 7
    %v111 = vsub.s32 0, %v110
    %v112 = vrot.slane %v107, %v111
    %v114 = vadd.f32 %v103, %v112
    %v115 = vadd.f32 %v104, %v112
    %v116 = vadd.f32 %v105, %v112
    %v117 = vadd.f32 %v106, %v112
    %v118 = vpack.c.bf16 %v115, %v114
    %v119 = vpack.c.bf16 %v117, %v116
    %v120 = vld [vmem:[%s3] sm:$0xf]
    %v121 = vld [vmem:[%s3 + $0x4] sm:$0xf]
    %v122 = vld [vmem:[%s3 + $0x8] sm:$0xf]
    %v123 = vld [vmem:[%s3 + $0xc] sm:$0xf]
    %v124 = vld [vmem:[%s3 + $0x10] sm:$0xf]
    %v125 = vld [vmem:[%s3 + $0x14] sm:$0xf]
    %v126 = vld [vmem:[%s3 + $0x18] sm:$0xf]
    %v127 = vld [vmem:[%s3 + $0x1c] sm:$0xf]
    %v128 = vld [vmem:[%s4] sm:$0x1]
    %v130 = vlaneseq
    %v131 = vshrl.u32 %v130, 7
    %v132 = vsub.s32 0, %v131
    %v133 = vrot.slane %v128, %v132
    %v143 = vunpack.c.l.b16 %v120
    %v144 = vunpack.c.l.b16 %v121
    %v145 = vunpack.c.l.b16 %v122
    %v146 = vunpack.c.l.b16 %v123
    %v147 = vunpack.c.l.b16 %v124
    %v148 = vunpack.c.l.b16 %v125
    %v149 = vunpack.c.l.b16 %v126
    %v150 = vunpack.c.l.b16 %v127
    %v151 = vpack.c.b16 %v144, %v143
    %v152 = vpack.c.b16 %v146, %v145
    %v153 = vpack.c.b16 %v148, %v147
    %v154 = vpack.c.b16 %v150, %v149
    %v160 = vsel %vm42, %v118, 0
    %v163 = vsel %vm42, %v119, 0
    %165 = vmatprep.subr.bf16.mxu0 0
    %166 = vmatpush1.bf16.msra.mxu0 0
    %167 = vmatprep.subr.bf16.mxu0 0
    %168 = vmatpush1.bf16.msra.mxu0 0
    %169 = vmatprep.subr.bf16.mxu0 0
    %170 = vmatpush1.bf16.msra.mxu0 0
    %171 = vmatprep.subr.bf16.mxu0 0
    %172 = vmatpush1.bf16.msra.mxu0 0
    %173 = vmatprep.subr.bf16.mxu0 0
    %174 = vmatpush1.bf16.msra.mxu0 %v154
    %175 = vmatprep.subr.bf16.mxu0 0
    %176 = vmatpush1.bf16.msra.mxu0 %v153
    %177 = vmatprep.subr.bf16.mxu0 0
    %178 = vmatpush1.bf16.msra.mxu0 %v152
    %179 = vmatprep.subr.bf16.mxu0 0
    %180 = vmatpush1.bf16.msra.mxu0 %v151
    %181 = vmatprep.subr.bf16.mxu0 0
    %182 = vmatpush2.bf16.msra.mxu0 0
    %183 = vmatprep.subr.bf16.mxu0 0
    %184 = vmatpush2.bf16.msra.mxu0 0
    %185 = vmatprep.subr.bf16.mxu0 0
    %186 = vmatpush2.bf16.msra.mxu0 0
    %187 = vmatprep.subr.bf16.mxu0 0
    %188 = vmatpush2.bf16.msra.mxu0 0
    %189 = vmatprep.subr.bf16.mxu0 0
    %190 = vmatpush2.bf16.msra.mxu0 0
    %191 = vmatprep.subr.bf16.mxu0 0
    %192 = vmatpush2.bf16.msra.mxu0 0
    %193 = vmatprep.subr.bf16.mxu0 0
    %194 = vmatpush2.bf16.msra.mxu0 0
    %195 = vmatprep.subr.bf16.mxu0 0
    %196 = vmatpush2.bf16.msra.mxu0 0
    %197 = vmatprep.mubr.bf16.mxu0 0
    %198 = vmatmul.mubr.bf16.gmra.mxu0 %v160
    %v199 = vpop.f32.mrf.mxu0
    %v200 = vadd.f32 %v133, %v199
    %v201 = vpop.f32.mrf.mxu0
    %v202 = vpop.f32.mrf.mxu0
    %v203 = vadd.f32 %v133, %v202
    %v204 = vpop.f32.mrf.mxu0
    %205 = vmatprep.mubr.bf16.mxu0 0
    %206 = vmatmul.mubr.bf16.gmra.mxu0 %v163
    %v207 = vpop.f32.mrf.mxu0
    %v208 = vadd.f32 %v133, %v207
    %v209 = vpop.f32.mrf.mxu0
    %v210 = vpop.f32.mrf.mxu0
    %v211 = vadd.f32 %v133, %v210
    %v212 = vpop.f32.mrf.mxu0
    %213 = vdwg.mxu0
    %v214 = vmax.f32 %v200, 0.0
    %v215 = vmax.f32 %v203, 0.0
    %v216 = vmax.f32 %v208, 0.0
    %v217 = vmax.f32 %v211, 0.0
    %vm218 = vcmask 261120
    %v219 = vsel %vm218, %v214, 0.0
    %220 = vadd.xlane.f32.xlu0 %v219
    %v221 = vpop.xlane.xlu0 %220
    %v222 = vsel %vm218, %v215, 0.0
    %223 = vadd.xlane.f32.xlu0 %v222
    %v224 = vpop.xlane.xlu0 %223
    %v225 = vsel %vm218, %v216, 0.0
    %226 = vadd.xlane.f32.xlu0 %v225
    %v227 = vpop.xlane.xlu0 %226
    %v228 = vsel %vm218, %v217, 0.0
    %229 = vadd.xlane.f32.xlu0 %v228
    %v230 = vpop.xlane.xlu0 %229
    %v231 = vrcp.pop 32.0
    %v232 = vmul.f32 %v221, %v231
    %v233 = vmul.f32 %v224, %v231
    %v234 = vmul.f32 %v227, %v231
    %v235 = vmul.f32 %v230, %v231
    %v236 = vsub.f32 %v214, %v232
    %v237 = vsub.f32 %v215, %v233
    %v238 = vsub.f32 %v216, %v234
    %v239 = vsub.f32 %v217, %v235
    %v240 = vmul.f32 %v236, %v236
    %v241 = vmul.f32 %v237, %v237
    %v242 = vmul.f32 %v238, %v238
    %v243 = vmul.f32 %v239, %v239
    %v244 = vsel %vm218, %v240, 0.0
    %245 = vadd.xlane.f32.xlu0 %v244
    %v246 = vpop.xlane.xlu0 %245
    %v247 = vsel %vm218, %v241, 0.0
    %248 = vadd.xlane.f32.xlu0 %v247
    %v249 = vpop.xlane.xlu0 %248
    %v250 = vsel %vm218, %v242, 0.0
    %251 = vadd.xlane.f32.xlu0 %v250
    %v252 = vpop.xlane.xlu0 %251
    %v253 = vsel %vm218, %v243, 0.0
    %254 = vadd.xlane.f32.xlu0 %v253
    %v255 = vpop.xlane.xlu0 %254
    %v256 = vmul.f32 %v246, %v231
    %v257 = vmul.f32 %v249, %v231
    %v258 = vmul.f32 %v252, %v231
    %v259 = vmul.f32 %v255, %v231
    %v260 = vadd.f32 %v256, 1e-05
    %v261 = vadd.f32 %v257, 1e-05
    %v262 = vadd.f32 %v258, 1e-05
    %v263 = vadd.f32 %v259, 1e-05
    %v264 = vrsqrt.pop %v260
    %v265 = vrsqrt.pop %v261
    %v266 = vrsqrt.pop %v262
    %v267 = vrsqrt.pop %v263
    %v268 = vmul.f32 %v236, %v264
    %v269 = vmul.f32 %v237, %v265
    %v270 = vmul.f32 %v238, %v266
    %v271 = vmul.f32 %v239, %v267
    %v272 = vld [vmem:[%s5] sm:$0x1]
    %v274 = vlaneseq
    %v275 = vshrl.u32 %v274, 7
    %v276 = vsub.s32 0, %v275
    %v277 = vrot.slane %v272, %v276
    %v279 = vmul.f32 %v268, %v277
    %v280 = vmul.f32 %v269, %v277
    %v281 = vmul.f32 %v270, %v277
    %v282 = vmul.f32 %v271, %v277
    %v283 = vld [vmem:[%s6] sm:$0x1]
    %v285 = vlaneseq
    %v286 = vshrl.u32 %v285, 7
    %v287 = vsub.s32 0, %v286
    %v288 = vrot.slane %v283, %v287
    %v290 = vadd.f32 %v279, %v288
    %v291 = vadd.f32 %v280, %v288
    %v292 = vadd.f32 %v281, %v288
    %v293 = vadd.f32 %v282, %v288
    %v294 = vpack.c.bf16 %v291, %v290
    %v295 = vpack.c.bf16 %v293, %v292
    %v296 = vld [vmem:[%s7] sm:$0xf]
    %v297 = vld [vmem:[%s7 + $0x4] sm:$0xf]
    %v298 = vld [vmem:[%s7 + $0x8] sm:$0xf]
    %v299 = vld [vmem:[%s7 + $0xc] sm:$0xf]
    %v300 = vld [vmem:[%s8] sm:$0x1]
    %v302 = vlaneseq
    %v303 = vshrl.u32 %v302, 7
    %v304 = vsub.s32 0, %v303
    %v305 = vrot.slane %v300, %v304
    %v311 = vunpack.c.l.b16 %v296
    %v312 = vunpack.c.l.b16 %v297
    %v313 = vunpack.c.l.b16 %v298
    %v314 = vunpack.c.l.b16 %v299
    %v315 = vpack.c.b16 %v312, %v311
    %v316 = vpack.c.b16 %v314, %v313
    %v320 = vsel %vm218, %v294, 0
    %v323 = vsel %vm218, %v295, 0
    %325 = vmatprep.subr.bf16.mxu0 0
    %326 = vmatpush1.bf16.msra.mxu0 0
    %327 = vmatprep.subr.bf16.mxu0 0
    %328 = vmatpush1.bf16.msra.mxu0 0
    %329 = vmatprep.subr.bf16.mxu0 0
    %330 = vmatpush1.bf16.msra.mxu0 0
    %331 = vmatprep.subr.bf16.mxu0 0
    %332 = vmatpush1.bf16.msra.mxu0 0
    %333 = vmatprep.subr.bf16.mxu0 0
    %334 = vmatpush1.bf16.msra.mxu0 0
    %335 = vmatprep.subr.bf16.mxu0 0
    %336 = vmatpush1.bf16.msra.mxu0 0
    %337 = vmatprep.subr.bf16.mxu0 0
    %338 = vmatpush1.bf16.msra.mxu0 %v316
    %339 = vmatprep.subr.bf16.mxu0 0
    %340 = vmatpush1.bf16.msra.mxu0 %v315
    %341 = vmatprep.subr.bf16.mxu0 0
    %342 = vmatpush2.bf16.msra.mxu0 0
    %343 = vmatprep.subr.bf16.mxu0 0
    %344 = vmatpush2.bf16.msra.mxu0 0
    %345 = vmatprep.subr.bf16.mxu0 0
    %346 = vmatpush2.bf16.msra.mxu0 0
    %347 = vmatprep.subr.bf16.mxu0 0
    %348 = vmatpush2.bf16.msra.mxu0 0
    %349 = vmatprep.subr.bf16.mxu0 0
    %350 = vmatpush2.bf16.msra.mxu0 0
    %351 = vmatprep.subr.bf16.mxu0 0
    %352 = vmatpush2.bf16.msra.mxu0 0
    %353 = vmatprep.subr.bf16.mxu0 0
    %354 = vmatpush2.bf16.msra.mxu0 0
    %355 = vmatprep.subr.bf16.mxu0 0
    %356 = vmatpush2.bf16.msra.mxu0 0
    %357 = vmatprep.mubr.bf16.mxu0 0
    %358 = vmatmul.mubr.bf16.gmra.mxu0 %v320
    %v359 = vpop.f32.mrf.mxu0
    %v360 = vadd.f32 %v305, %v359
    %v361 = vpop.f32.mrf.mxu0
    %v362 = vpop.f32.mrf.mxu0
    %v363 = vadd.f32 %v305, %v362
    %v364 = vpop.f32.mrf.mxu0
    %365 = vmatprep.mubr.bf16.mxu0 0
    %366 = vmatmul.mubr.bf16.gmra.mxu0 %v323
    %v367 = vpop.f32.mrf.mxu0
    %v368 = vadd.f32 %v305, %v367
    %v369 = vpop.f32.mrf.mxu0
    %v370 = vpop.f32.mrf.mxu0
    %v371 = vadd.f32 %v305, %v370
    %v372 = vpop.f32.mrf.mxu0
    %373 = vdwg.mxu0
    %v374 = vpack.c.bf16 %v363, %v360
    %v375 = vpack.c.bf16 %v371, %v368
    %v378 = vunpack.c.l.b16 %v374
    %v379 = vunpack.c.h.b16 %v374
    %v380 = vunpack.c.l.b16 %v375
    %v381 = vunpack.c.h.b16 %v375
    %v382 = vpack.c.b16 %v378, %v378
    %v383 = vpack.c.b16 %v379, %v379
    %v384 = vpack.c.b16 %v380, %v380
    %v385 = vpack.c.b16 %v381, %v381
    %390 = vst [vmem:[#allocation2] sm:$0xf] %v382
    %391 = vst [vmem:[#allocation2 + $0x4] sm:$0xf] %v383
    %392 = vst [vmem:[#allocation2 + $0x8] sm:$0xf] %v384
    %393 = vst [vmem:[#allocation2 + $0xc] sm:$0xf] %v385
    // Predicated region
    $region38: #{tpu_custom_call.1} parent=1 // pred_check
      _
    $region39: #{tpu_custom_call.1} parent=1 // pred_check_branch
      %395 = sbr.rel (0) target = $region41
    $region40: #{tpu_custom_call.1} parent=1 // pred_region
      %s397 = ssub.s32 256, 256
      %398 = vsyncadd [#allocation3], %s397
      %s399 = sshll.u32 [#allocation2], 4
      %s400 = int_to_ptr.vmem [resolvable:$true] %s399
      %405 = dma.vmem_to_hbm [thread:$0]  %s400, 256, %s9, [#allocation3], 64, 64, 4
    $region41: #{tpu_custom_call.1} parent=1 // pred_fallthru
      _
    // Predicated region
    $region42: #{tpu_custom_call.1} parent=1 // pred_check
      _
    $region43: #{tpu_custom_call.1} parent=1 // pred_check_branch
      %407 = sbr.rel (0) target = $region45
    $region44: #{tpu_custom_call.1} parent=1 // pred_region
      %408 = dma.done [#allocation3], 256
    $region45: #{tpu_custom_call.1} parent=1 // pred_fallthru
      _
    %409 = vsyncpa [#allocation3], 1

</llo_original>
